<compile_context>
chip_gen: v6e
topology: v6e:2x2x1
jax: 0.10.0
libtpu: 0.0.40
codegen_flags: <defaults>
</compile_context>

<pallas_src>
import functools

import jax
import jax.numpy as jnp
from jax import lax
from jax.experimental import pallas as pl
from jax.experimental.pallas import tpu as pltpu


def _class_loss_kernel(preds_ref, labels_ref, out_ref, acc_ref, *,
                       tiles_per_core, tn, n_rows):
    core = pl.program_id(0)
    i = pl.program_id(1)

    @pl.when(i == 0)
    def _init():
        acc_ref[...] = jnp.zeros_like(acc_ref)

    p = preds_ref[...]                                   # (TN, C) native dtype
    lab = labels_ref[...]                                # (TN, 1) int32
    c = p.shape[-1]

    # Single lane-row iota, broadcast against (TN,1) labels in the compare.
    col = lax.broadcasted_iota(jnp.int32, (1, c), 1)     # (1, C)
    onehot = col == lab                                  # (TN, C) bool

    # Target-class logit gathered in native dtype (exact: one nonzero per row),
    # upcast to f32 only afterwards.
    picked = jnp.sum(jnp.where(onehot, p, 0), axis=-1,
                     keepdims=True).astype(jnp.float32)  # (TN, 1)

    # Numerically stable logsumexp over the class (lane) axis. max() is exact
    # in the native dtype; the f32 cast fuses into the exp chain.
    m = jnp.max(p, axis=-1, keepdims=True)               # (TN, 1) native
    m32 = m.astype(jnp.float32)
    ex = jnp.exp(p.astype(jnp.float32) - m32)            # (TN, C) f32
    lse = m32 + jnp.log(jnp.sum(ex, axis=-1, keepdims=True))  # (TN, 1)

    # Mask: ignore_index == -1 rows and rows past N (ragged last tile, or a
    # clamped/duplicated tile on a second core) contribute exactly 0.
    tile = core * tiles_per_core + i
    row = tile * tn + lax.broadcasted_iota(jnp.int32, (tn, 1), 0)
    valid = (lab != -1) & (row < n_rows)
    loss = jnp.where(valid, lse - picked, 0.0)           # select, never mul-mask

    acc_ref[...] += jnp.sum(loss)

    @pl.when(i == tiles_per_core - 1)
    def _finalize():
        out_ref[...] = acc_ref[...].reshape(out_ref.shape)


def _default_num_cores():
    # 2 TensorCores per chip only on v7x; 1 on v5e/v6e (avoids the duplicated
    # clamped-tile DMA that a dummy second "core" pass would cause).
    try:
        kind = str(getattr(jax.devices()[0], "device_kind", "") or "")
    except Exception:
        kind = ""
    return 2 if "v7" in kind.lower() else 1


def class_loss(preds, labels, *, num_cores=None,
               vmem_budget_bytes=24 * 1024 * 1024):
    """preds: (N, C) float (any float dtype), labels: (N,) int with -1 = ignore.
    Returns (sum of per-sample CE losses, N) matching the PyTorch ClassLoss.
    Note: labels >= C (other than -1) silently contribute lse instead of
    erroring like PyTorch."""
    n, c = preds.shape
    if num_cores is None:
        num_cores = _default_num_cores()
    labels2d = labels.reshape(n, 1).astype(jnp.int32)

    dsize = jnp.dtype(preds.dtype).itemsize
    # Per-row VMEM cost: double-buffered (1, C) logits row + ~4 KiB covering the
    # lane-padded labels buffers and the (TN,1)->(TN,128) keepdims temporaries.
    per_row_bytes = 2 * c * dsize + 4096
    n_pad8 = ((n + 7) // 8) * 8
    rows = max(8, (vmem_budget_bytes // per_row_bytes) // 8 * 8)
    tn = int(min(rows, 2048, n_pad8))
    n_tiles = pl.cdiv(n, tn)
    tiles_per_core = pl.cdiv(n_tiles, num_cores)

    def block_idx(core, i):
        # Clamp so a core never issues a fully out-of-bounds DMA; duplicated
        # tiles are zeroed inside the kernel via the row < N select.
        return jnp.minimum(core * tiles_per_core + i, n_tiles - 1)

    kernel = functools.partial(
        _class_loss_kernel, tiles_per_core=tiles_per_core, tn=tn, n_rows=n)

    cost = pl.CostEstimate(
        flops=6 * n * c,
        transcendentals=n * c,
        bytes_accessed=n * c * dsize + 4 * n + 4 * num_cores)

    partials = pl.pallas_call(
        kernel,
        out_shape=jax.ShapeDtypeStruct((num_cores, 1, 1), jnp.float32),
        grid=(num_cores, tiles_per_core),
        in_specs=[
            pl.BlockSpec((tn, c), lambda core, i: (block_idx(core, i), 0)),
            pl.BlockSpec((tn, 1), lambda core, i: (block_idx(core, i), 0)),
        ],
        out_specs=pl.BlockSpec((1, 1, 1), lambda core, i: (core, 0, 0)),
        scratch_shapes=[pltpu.VMEM((1, 1), jnp.float32)],
        compiler_params=pltpu.CompilerParams(
            dimension_semantics=("parallel", "arbitrary"),
            vmem_limit_bytes=32 * 1024 * 1024,
        ),
        cost_estimate=cost,
    )(preds, labels2d)

    return jnp.sum(partials), n


def _reference(preds, labels):
    # Same semantics as torch CE(reduction='none', ignore_index=-1).sum().
    logp = jax.nn.log_softmax(preds.astype(jnp.float32), axis=-1)
    safe = jnp.where(labels == -1, 0, labels).astype(jnp.int32)
    per = -jnp.take_along_axis(logp, safe[:, None], axis=-1)[:, 0]
    per = jnp.where(labels == -1, 0.0, per)
    return per.sum()


if __name__ == "__main__":
    key = jax.random.PRNGKey(0)
    kp, kl, kp2, kl2 = jax.random.split(key, 4)

    # Small f32 case (matches the module's (N, C) logits / (N,) labels).
    N, C = 8, 32
    preds = jax.random.normal(kp, (N, C), dtype=jnp.float32)
    labels = jax.random.randint(kl, (N,), 0, C, dtype=jnp.int32)
    labels = labels.at[3].set(-1)  # exercise ignore_index=-1

    loss_sum, batch = class_loss(preds, labels)
    loss_sum = jax.block_until_ready(loss_sum)
    assert batch == N
    ref = _reference(preds, labels)
    assert jnp.allclose(loss_sum, ref, atol=1e-4, rtol=1e-4), (loss_sum, ref)

    # Ragged-N bf16 case: exercises native-dtype streaming, the native-dtype
    # one-hot gather, and partial-tile row masking.
    N2, C2 = 50, 256
    preds2 = jax.random.normal(kp2, (N2, C2), dtype=jnp.float32).astype(jnp.bfloat16)
    labels2 = jax.random.randint(kl2, (N2,), 0, C2, dtype=jnp.int32)
    labels2 = labels2.at[0].set(-1).at[17].set(-1)

    loss_sum2, batch2 = class_loss(preds2, labels2)
    loss_sum2 = jax.block_until_ready(loss_sum2)
    assert batch2 == N2
    ref2 = _reference(preds2, labels2)
    assert jnp.allclose(loss_sum2, ref2, atol=1e-2, rtol=1e-3), (loss_sum2, ref2)

    print("KERNEL_OK")
</pallas_src>

<mosaic_0001>
module attributes {stable_mosaic.version = 11 : i64} {
  func.func @_class_loss_kernel(%arg0: i32, %arg1: i32, %arg2: memref<8x32xf32, #tpu.memory_space<vmem>>, %arg3: memref<8x1xi32, #tpu.memory_space<vmem>>, %arg4: memref<1x1x1xf32, #tpu.memory_space<vmem>>, %arg5: memref<1x1xf32, #tpu.memory_space<vmem>>) attributes {dimension_semantics = [#tpu.dimension_semantics<parallel>, #tpu.dimension_semantics<arbitrary>], iteration_bounds = array<i64: 1, 1>, scalar_prefetch = 0 : i64, scratch_operands = 1 : i64, tpu.core_type = #tpu.core_type<tc>, window_params = [{transform_indices = @transform_0, window_bounds = array<i64: 8, 32>}, {transform_indices = @transform_1, window_bounds = array<i64: 8, 1>}, {transform_indices = @transform_2, window_bounds = array<i64: 1, 1, 1>}]} {
    %c0_i32 = arith.constant 0 : i32
    %0 = arith.cmpi eq, %arg1, %c0_i32 : i32
    %1 = arith.extui %0 : i1 to i32
    %c0_i32_0 = arith.constant 0 : i32
    %2 = arith.cmpi ne, %1, %c0_i32_0 : i32
    scf.if %2 {
      %cst_16 = arith.constant 0.000000e+00 : f32
      %48 = vector.broadcast %cst_16 : f32 to vector<1x1xf32>
      %c0_17 = arith.constant 0 : index
      %c0_18 = arith.constant 0 : index
      %49 = vector.load %arg5[%c0_17, %c0_18] : memref<1x1xf32, #tpu.memory_space<vmem>>, vector<1x1xf32>
      tpu.vector_store %arg5[%c0_17, %c0_18], %48 {strides = array<i32>} : memref<1x1xf32, #tpu.memory_space<vmem>>, vector<1x1xf32>,
    } else {
    }
    %c0 = arith.constant 0 : index
    %c0_1 = arith.constant 0 : index
    %3 = vector.load %arg2[%c0, %c0_1] : memref<8x32xf32, #tpu.memory_space<vmem>>, vector<8x32xf32>
    %c0_2 = arith.constant 0 : index
    %c0_3 = arith.constant 0 : index
    %4 = vector.load %arg3[%c0_2, %c0_3] : memref<8x1xi32, #tpu.memory_space<vmem>>, vector<8x1xi32>
    %5 = tpu.iota {dimensions = array<i32: 1>} : vector<1x32xi32>
    %6 = vector.broadcast %5 : vector<1x32xi32> to vector<8x32xi32>
    %7 = vector.broadcast %4 : vector<8x1xi32> to vector<8x32xi32>
    %8 = arith.cmpi eq, %6, %7 : vector<8x32xi32>
    %c0_i32_4 = arith.constant 0 : i32
    %9 = arith.sitofp %c0_i32_4 : i32 to f32
    %10 = vector.broadcast %9 : f32 to vector<8x32xf32>
    %11 = arith.select %8, %3, %10 : vector<8x32xi1>, vector<8x32xf32>
    %cst = arith.constant dense<0.000000e+00> : vector<8xf32>
    %12 = vector.multi_reduction <add>, %11, %cst [1] : vector<8x32xf32> to vector<8xf32>
    %13 = vector.shape_cast %12 : vector<8xf32> to vector<8x1xf32>
    %cst_5 = arith.constant dense<0xFF800000> : vector<8xf32>
    %14 = vector.multi_reduction <maximumf>, %3, %cst_5 [1] : vector<8x32xf32> to vector<8xf32>
    %15 = vector.shape_cast %14 : vector<8xf32> to vector<8x1xf32>
    %16 = vector.broadcast %15 : vector<8x1xf32> to vector<8x32xf32>
    %17 = arith.subf %3, %16 : vector<8x32xf32>
    %18 = math.exp %17 : vector<8x32xf32>
    %cst_6 = arith.constant dense<0.000000e+00> : vector<8xf32>
    %19 = vector.multi_reduction <add>, %18, %cst_6 [1] : vector<8x32xf32> to vector<8xf32>
    %20 = vector.shape_cast %19 : vector<8xf32> to vector<8x1xf32>
    %21 = math.log %20 : vector<8x1xf32>
    %22 = arith.addf %15, %21 : vector<8x1xf32>
    %c1_i32 = arith.constant 1 : i32
    %23 = arith.muli %arg0, %c1_i32 : i32
    %24 = arith.addi %23, %arg1 : i32
    %c8_i32 = arith.constant 8 : i32
    %25 = arith.muli %24, %c8_i32 : i32
    %26 = tpu.iota {dimensions = array<i32: 0>} : vector<8x1xi32>
    %27 = vector.broadcast %25 : i32 to vector<8x1xi32>
    %28 = arith.addi %27, %26 : vector<8x1xi32>
    %c-1_i32 = arith.constant -1 : i32
    %29 = vector.broadcast %c-1_i32 : i32 to vector<8x1xi32>
    %30 = arith.cmpi ne, %4, %29 : vector<8x1xi32>
    %c8_i32_7 = arith.constant 8 : i32
    %31 = vector.broadcast %c8_i32_7 : i32 to vector<8x1xi32>
    %32 = arith.cmpi slt, %28, %31 : vector<8x1xi32>
    %33 = arith.andi %30, %32 : vector<8x1xi1>
    %34 = arith.subf %22, %13 : vector<8x1xf32>
    %cst_8 = arith.constant 0.000000e+00 : f32
    %35 = vector.broadcast %cst_8 : f32 to vector<8x1xf32>
    %36 = arith.select %33, %34, %35 : vector<8x1xi1>, vector<8x1xf32>
    %c0_9 = arith.constant 0 : index
    %c0_10 = arith.constant 0 : index
    %37 = vector.load %arg5[%c0_9, %c0_10] : memref<1x1xf32, #tpu.memory_space<vmem>>, vector<1x1xf32>
    %38 = vector.shape_cast %36 : vector<8x1xf32> to vector<1x8x1xf32>
    %cst_11 = arith.constant dense<0.000000e+00> : vector<1xf32>
    %39 = vector.multi_reduction <add>, %38, %cst_11 [1, 2] : vector<1x8x1xf32> to vector<1xf32>
    %40 = vector.shape_cast %39 : vector<1xf32> to vector<1x1x1xf32>
    %41 = vector.extract %40[0, 0, 0] : f32 from vector<1x1x1xf32>
    %42 = vector.broadcast %41 : f32 to vector<1x1xf32>
    %43 = arith.addf %37, %42 : vector<1x1xf32>
    %c0_12 = arith.constant 0 : index
    %c0_13 = arith.constant 0 : index
    %44 = vector.load %arg5[%c0_12, %c0_13] : memref<1x1xf32, #tpu.memory_space<vmem>>, vector<1x1xf32>
    tpu.vector_store %arg5[%c0_12, %c0_13], %43 {strides = array<i32>} : memref<1x1xf32, #tpu.memory_space<vmem>>, vector<1x1xf32>,
    %c0_i32_14 = arith.constant 0 : i32
    %45 = arith.cmpi eq, %arg1, %c0_i32_14 : i32
    %46 = arith.extui %45 : i1 to i32
    %c0_i32_15 = arith.constant 0 : i32
    %47 = arith.cmpi ne, %46, %c0_i32_15 : i32
    scf.if %47 {
      %c0_16 = arith.constant 0 : index
      %c0_17 = arith.constant 0 : index
      %48 = vector.load %arg5[%c0_16, %c0_17] : memref<1x1xf32, #tpu.memory_space<vmem>>, vector<1x1xf32>
      %49 = vector.shape_cast %48 : vector<1x1xf32> to vector<1x1x1xf32>
      %c0_18 = arith.constant 0 : index
      %c0_19 = arith.constant 0 : index
      %c0_20 = arith.constant 0 : index
      %50 = vector.load %arg4[%c0_18, %c0_19, %c0_20] : memref<1x1x1xf32, #tpu.memory_space<vmem>>, vector<1x1x1xf32>
      tpu.vector_store %arg4[%c0_18, %c0_19, %c0_20], %49 {strides = array<i32>} : memref<1x1x1xf32, #tpu.memory_space<vmem>>, vector<1x1x1xf32>,
    } else {
    }
    return
  }
  func.func @transform_0(%arg0: i32, %arg1: i32) -> (i32, i32) {
    %c1_i32 = arith.constant 1 : i32
    %0 = arith.muli %arg0, %c1_i32 : i32
    %1 = arith.addi %0, %arg1 : i32
    %c0_i32 = arith.constant 0 : i32
    %2 = arith.minsi %1, %c0_i32 : i32
    %c0_i32_0 = arith.constant 0 : i32
    %c0_i32_1 = arith.constant 0 : i32
    return %2, %c0_i32_0 : i32, i32
  }
  func.func @transform_1(%arg0: i32, %arg1: i32) -> (i32, i32) {
    %c1_i32 = arith.constant 1 : i32
    %0 = arith.muli %arg0, %c1_i32 : i32
    %1 = arith.addi %0, %arg1 : i32
    %c0_i32 = arith.constant 0 : i32
    %2 = arith.minsi %1, %c0_i32 : i32
    %c0_i32_0 = arith.constant 0 : i32
    %c0_i32_1 = arith.constant 0 : i32
    return %2, %c0_i32_0 : i32, i32
  }
  func.func @transform_2(%arg0: i32, %arg1: i32) -> (i32, i32, i32) {
    %c0_i32 = arith.constant 0 : i32
    %c0_i32_0 = arith.constant 0 : i32
    %c0_i32_1 = arith.constant 0 : i32
    return %arg0, %c0_i32, %c0_i32_0 : i32, i32, i32
  }
}

</mosaic_0001>

<llo_original>
// kernel: tpu_custom_call.1
$region0: #{tpu_custom_call.1}
  #allocation0 [shape = 'u32[]', space=smem, size = 0x4, offset = 0x4, fixed_abs, tag = 'smem constant byte address 0x4 - core index']
  #allocation1 [shape = 'u32[144,128]{1,0:T(1,128)}', space=vmem, size = 0x12000, scoped, tag = 'internal scratch']
  #allocation2 [shape = 'f32[1,1]{1,0:T(1,128)}', space=vmem, size = 0x200, scoped, tag = 'scratch operand']
  %s0 = inlined_call_operand.vmem [shape: f32[8,32], index: 0, kind: input, shape index: {}]
  %s1 = inlined_call_operand.vmem [shape: s32[8,1], index: 1, kind: input, shape index: {}]
  %s2 = inlined_call_operand.hbm [shape: f32[1,1,1], index: 2, kind: output, shape index: {}]
  %s3 = sld [smem:[#allocation0]]
  $region26: #{tpu_custom_call.1} parent=0
    _
  %s5 = ssub.s32 1, %s3
  %s6 = scalar_select 0, %s5, %s3
  $region1: #{tpu_custom_call.1} parent=0
    #allocation3 [shape = 'u8[512]{0}', space=vmem, size = 0x400, scoped, tag = 'output window, operand 0, single buffered']
    #allocation4 [shape = 's32[1]{0}', space=sflag, size = 0x4, scoped, tag = 'scoped memory for tpu_custom_call.1']
    %7 = vsyncpa [#allocation4], 0
    // Predicated region
    $region2: #{tpu_custom_call.1} parent=1 // pred_check
      _
    $region3: #{tpu_custom_call.1} parent=1 // pred_check_branch
      %9 = sbr.rel (0) target = $region5
    $region4: #{tpu_custom_call.1} parent=1 // pred_region
      %s10 = sadd.s32 0, 0
      %p11 = scmp.lt.s32.totalorder %s10, 0
      %s12 = scalar_select %p11, %s10, 0
      %p13 = scmp.lt.s32.totalorder %s12, 0
      %s14 = scalar_select %p13, %s12, 0
      %s15 = smul.addr %s14, 8
      %s16 = scalar_lea.vmem %s0, %s15
      %s17 = sadd.s32 0, 0
      %p18 = scmp.lt.s32.totalorder %s17, 0
      %s19 = scalar_select %p18, %s17, 0
    $region5: #{tpu_custom_call.1} parent=1 // pred_fallthru
      _
    // Predicated region
    $region6: #{tpu_custom_call.1} parent=1 // pred_check
      _
    $region7: #{tpu_custom_call.1} parent=1 // pred_check_branch
      %21 = sbr.rel (0) target = $region9
    $region8: #{tpu_custom_call.1} parent=1 // pred_region
      %s22 = sadd.s32 0, 0
      %p23 = scmp.lt.s32.totalorder %s22, 0
      %s24 = scalar_select %p23, %s22, 0
      %p25 = scmp.lt.s32.totalorder %s24, 0
      %s26 = scalar_select %p25, %s24, 0
      %s27 = smul.addr %s26, 8
      %s28 = scalar_lea.vmem %s1, %s27
      %s29 = sadd.s32 0, 0
      %p30 = scmp.lt.s32.totalorder %s29, 0
      %s31 = scalar_select %p30, %s29, 0
    $region9: #{tpu_custom_call.1} parent=1 // pred_fallthru
      _
    %s32 = sadd.s32 0, 0
    %p33 = scmp.lt.s32.totalorder %s32, 0
    %s34 = scalar_select %p33, %s32, 0
    %p35 = scmp.lt.s32.totalorder %s34, 0
    %s36 = scalar_select %p35, %s34, 0
    %s37 = smul.addr %s36, 8
    %s38 = scalar_lea.vmem %s0, %s37
    %s39 = sadd.s32 0, 0
    %p40 = scmp.lt.s32.totalorder %s39, 0
    %s41 = scalar_select %p40, %s39, 0
    %p42 = scmp.lt.s32.totalorder %s41, 0
    %s43 = scalar_select %p42, %s41, 0
    %s44 = smul.addr %s43, 8
    %s45 = scalar_lea.vmem %s1, %s44
    %s46 = sadd.s32 0, 0
    %p47 = scmp.lt.s32.totalorder %s46, 0
    %s48 = scalar_select %p47, %s46, 0
    %p49 = scmp.lt.s32.totalorder %s48, 0
    %s50 = scalar_select %p49, %s48, 0
    %s51 = smul.addr %s50, 8
    %s52 = scalar_lea.vmem %s0, %s51
    %s53 = sadd.s32 0, 0
    %p54 = scmp.lt.s32.totalorder %s53, 0
    %s55 = scalar_select %p54, %s53, 0
    %s56 = sadd.s32 0, 0
    %p57 = scmp.lt.s32.totalorder %s56, 0
    %s58 = scalar_select %p57, %s56, 0
    %p59 = scmp.lt.s32.totalorder %s58, 0
    %s60 = scalar_select %p59, %s58, 0
    %s61 = smul.addr %s60, 8
    %s62 = scalar_lea.vmem %s1, %s61
    %s63 = sadd.s32 0, 0
    %p64 = scmp.lt.s32.totalorder %s63, 0
    %s65 = scalar_select %p64, %s63, 0
    %p66 = scmp.eq.s32.totalorder 0, 0
    // Predicated region
    $region10: #{tpu_custom_call.1} parent=1 // pred_check
      %p67 = pneg %p66
    $region11: #{tpu_custom_call.1} parent=1 // pred_check_branch
      %69 = sbr.rel (%p67) target = $region13
    $region12: #{tpu_custom_call.1} parent=1 // pred_region
      %vm70 = vcmask 0
      %71 = vst.msk [vmem:[#allocation2] sm:$0x1] %vm70, 0.0
    $region13: #{tpu_custom_call.1} parent=1 // pred_fallthru
      _
    %v72 = vld [vmem:[%s52] sm:$0xff]
    %v73 = vld [vmem:[%s62] sm:$0xff]
    %v74 = vlaneseq
    %v75 = vand.u32 %v74, 127
    %76 = vset.pattern.permute.xlu0 0
    %77 = vperm.xlu0 %76, %v73
    %v78 = vpop.permute.xlu0 %77
    %vm79 = vcmp.eq.s32.totalorder %v75, %v78
    %v80 = vsel %vm79, %v72, 0.0
    %vm81 = vcmask 261120
    %v82 = vsel %vm81, %v80, 0.0
    %83 = vadd.xlane.f32.xlu0 %v82
    %v84 = vpop.xlane.xlu0 %83
    %v85 = vsel %vm81, %v72, -inf
    %86 = vmax.xlane.f32.xlu0 %v85
    %v87 = vpop.xlane.xlu0 %86
    %v88 = vsub.f32 %v72, %v87
    %v89 = vmul.f32 %v88, 1.442695
    %v90 = vpow.pop %v89
    %v91 = vsel %vm81, %v90, 0.0
    %92 = vadd.xlane.f32.xlu0 %v91
    %v93 = vpop.xlane.xlu0 %92
    %v94 = vlog2.pop %v93
    %v95 = vmul.f32 %v94, 0.6931472
    %v96 = vadd.f32 %v87, %v95
    %s97 = sadd.s32 0, 0
    %s98 = smul.u32 %s97, 8
    %v99 = vlaneseq
    %v100 = vshrl.u32 %v99, 7
    %v101 = vstv %s98
    %v102 = vadd.s32 %v101, %v100
    %vm103 = vcmp.ne.s32.totalorder %v73, 4294967295
    %vm104 = vcmp.lt.s32.totalorder %v102, 8
    %vm105 = vmand %vm103, %vm104
    %v106 = vsub.f32 %v96, %v84
    %v107 = vsel %vm105, %v106, 0.0
    %v108 = vld [vmem:[#allocation2] sm:$0x1]
    %vm109 = vcmask 7168
    %v110 = vsel %vm109, %v107, 0.0
    %111 = vadd.xlane.f32.xlu0 %v110
    %v112 = vpop.xlane.xlu0 %111
    %v113 = vrot.slane %v112, 4
    %v114 = vadd.f32 %v112, %v113
    %v115 = vrot.slane %v114, 2
    %v116 = vadd.f32 %v114, %v115
    %v117 = vrot.slane %v116, 1
    %v118 = vadd.f32 %v116, %v117
    %s119 = vtos %v118
    %v120 = vstv %s119
    %v121 = vadd.f32 %v108, %v120
    %vm122 = vcmask 0
    %123 = vst.msk [vmem:[#allocation2] sm:$0x1] %vm122, %v121
    // Predicated region
    $region14: #{tpu_custom_call.1} parent=1 // pred_check
      %p124 = pneg %p66
    $region15: #{tpu_custom_call.1} parent=1 // pred_check_branch
      %126 = sbr.rel (%p124) target = $region17
    $region16: #{tpu_custom_call.1} parent=1 // pred_region
      %v127 = vld [vmem:[#allocation2] sm:$0x1]
      %128 = vst.msk [vmem:[#allocation3] sm:$0x1] %vm122, %v127
    $region17: #{tpu_custom_call.1} parent=1 // pred_fallthru
      _
    // Predicated region
    $region18: #{tpu_custom_call.1} parent=1 // pred_check
      _
    $region19: #{tpu_custom_call.1} parent=1 // pred_check_branch
      %130 = sbr.rel (0) target = $region21
    $region20: #{tpu_custom_call.1} parent=1 // pred_region
      %s132 = ssub.s32 16, 16
      %133 = vsyncadd [#allocation4], %s132
      %s135 = sshll.u32 [#allocation3], 4
      %s136 = int_to_ptr.vmem [resolvable:$true] %s135
      %138 = dma.vmem_to_hbm [thread:$0]  %s136, 16, %s2, [#allocation4]
    $region21: #{tpu_custom_call.1} parent=1 // pred_fallthru
      _
    // Predicated region
    $region22: #{tpu_custom_call.1} parent=1 // pred_check
      _
    $region23: #{tpu_custom_call.1} parent=1 // pred_check_branch
      %140 = sbr.rel (0) target = $region25
    $region24: #{tpu_custom_call.1} parent=1 // pred_region
      %141 = dma.done [#allocation4], 16
    $region25: #{tpu_custom_call.1} parent=1 // pred_fallthru
      _
    %142 = vsyncpa [#allocation4], 1

</llo_original>
